<compile_context>
chip_gen: v5e
topology: v5e:2x2
jax: 0.10.0
libtpu: 0.0.40
codegen_flags: <defaults>
</compile_context>

<pallas_src>
import functools

import jax
import jax.numpy as jnp
from jax.experimental import pallas as pl
from jax.experimental.pallas import tpu as pltpu

_LANE = 128
_SUBLANE_F32 = 8
_MIN_GRID_STEPS = 4


def _device_kind() -> str:
    try:
        return jax.devices()[0].device_kind.lower()
    except Exception:  # no device / weird backend -> conservative defaults
        return ""


def _block_bytes_for(kind: str):
    """(target block bytes, vmem_limit_bytes) per TPU generation."""
    if "v7" in kind:
        # ~3.2 TB/s HBM: bigger blocks to amortize per-step overhead; 4x(block)
        # double-buffer footprint (32 MiB) stays well under 64 MiB VMEM.
        return 8 * 1024 * 1024, 48 * 1024 * 1024
    # v5e / v6e: 4 MiB blocks (16 MiB footprint), raise scoped VMEM past v5e's
    # 16 MiB default.
    return 4 * 1024 * 1024, 32 * 1024 * 1024


def _compute_dtype(x_dtype, kind: str):
    # v6e/v7x VPUs execute bf16 natively; v5e does not -> upcast there.
    if x_dtype == jnp.bfloat16 and ("v6" in kind or "v7" in kind):
        return jnp.bfloat16
    return jnp.float32


def _h_swish_jnp(x):
    xf = x.astype(jnp.float32)
    return (xf * (jnp.clip(xf + 3.0, 0.0, 6.0) * (1.0 / 6.0))).astype(x.dtype)


def _h_swish_kernel(x_ref, o_ref, *, compute_dtype):
    x = x_ref[...].astype(compute_dtype)
    # relu6(x + 3) / 6  ->  clamp(x + 3, 0, 6) * (1/6)
    hs = jnp.clip(x + 3.0, 0.0, 6.0) * (1.0 / 6.0)
    o_ref[...] = (x * hs).astype(o_ref.dtype)


def _h_swish_flat(x_flat: jax.Array, *, donate: bool) -> jax.Array:
    """Pallas path for a flat array whose size is a multiple of 128."""
    n = x_flat.size
    rows = n // _LANE
    x2d = x_flat.reshape(rows, _LANE)  # free reshape (contiguous)

    dtype_size = jnp.dtype(x_flat.dtype).itemsize
    kind = _device_kind()
    target_bytes, vmem_limit = _block_bytes_for(kind)

    # Dtype-aware sublane tile: 8 rows (f32), 16 (bf16), 32 (int8/fp8).
    sublane = max(_SUBLANE_F32, 32 // dtype_size)

    block_rows = target_bytes // (_LANE * dtype_size)
    block_rows = max(sublane, (block_rows // sublane) * sublane)
    rows_padded = pl.cdiv(rows, sublane) * sublane
    if block_rows >= rows_padded:
        # Whole array would fit in one block -> no pipelining at all.  Split
        # into ~_MIN_GRID_STEPS blocks so read / compute / write overlap.
        step_rows = pl.cdiv(rows_padded, _MIN_GRID_STEPS)
        block_rows = max(sublane, pl.cdiv(step_rows, sublane) * sublane)
    block_rows = min(block_rows, rows_padded)

    grid = (pl.cdiv(rows, block_rows),)  # ragged final block masked by Pallas

    kernel = functools.partial(
        _h_swish_kernel, compute_dtype=_compute_dtype(x_flat.dtype, kind)
    )

    out2d = pl.pallas_call(
        kernel,
        out_shape=jax.ShapeDtypeStruct((rows, _LANE), x_flat.dtype),
        grid_spec=pltpu.PrefetchScalarGridSpec(
            num_scalar_prefetch=0,
            grid=grid,
            in_specs=[pl.BlockSpec((block_rows, _LANE), lambda i: (i, 0))],
            out_specs=pl.BlockSpec((block_rows, _LANE), lambda i: (i, 0)),
        ),
        compiler_params=pltpu.CompilerParams(
            dimension_semantics=("parallel",),   # megacore-shardable on v7x
            vmem_limit_bytes=vmem_limit,
        ),
        input_output_aliases=({0: 0} if donate else {}),
    )(x2d)
    return out2d.reshape(-1)


def h_swish(x: jax.Array, *, donate: bool = False) -> jax.Array:
    """Hard-swish (elementwise); accepts any shape (NCHW in the conv net)."""
    orig_shape = x.shape
    n = x.size
    if n == 0:
        return x

    main = (n // _LANE) * _LANE
    if main == 0:
        # Tiny tensor (<128 elems): one fused VPU pass beats a kernel launch.
        return _h_swish_jnp(x)

    x_flat = x.reshape(-1)  # free reshape of a contiguous array

    if main == n:
        # Common case (conv activations): no pad, no slice, no concat.
        out_flat = _h_swish_flat(x_flat, donate=donate)
    else:
        # Rare ragged case: kernel on the 128-aligned prefix, plain jnp on the
        # (<128-element) tail; only the tail write-back is extra work.
        head = _h_swish_flat(x_flat[:main], donate=False)
        tail = _h_swish_jnp(x_flat[main:])
        out_flat = jnp.concatenate([head, tail])

    return out_flat.reshape(orig_shape)


def _h_swish_ref(x):
    xf = x.astype(jnp.float32)
    return xf * (jnp.clip(xf + 3.0, 0.0, 6.0) / 6.0)


if __name__ == "__main__":
    key = jax.random.PRNGKey(0)

    # NCHW input, like the PyTorch module would see inside a conv net.
    x = jax.random.normal(key, (2, 4, 16, 16), dtype=jnp.float32) * 4.0
    out = jax.block_until_ready(h_swish(x))
    assert out.shape == x.shape and out.dtype == x.dtype
    assert jnp.allclose(out, _h_swish_ref(x), atol=1e-6, rtol=1e-6)

    # Odd element count (1155 elems): exercises the aligned-prefix + jnp-tail path.
    x_odd = jax.random.normal(jax.random.PRNGKey(1), (3, 5, 7, 11), jnp.float32) * 4.0
    out_odd = jax.block_until_ready(h_swish(x_odd))
    assert out_odd.shape == x_odd.shape and out_odd.dtype == x_odd.dtype
    assert jnp.allclose(out_odd, _h_swish_ref(x_odd), atol=1e-6, rtol=1e-6)

    # bf16 input: dtype-aware sublane rounding + (on v6e/v7x) native bf16 math.
    x_bf = (jax.random.normal(jax.random.PRNGKey(2), (2, 4, 16, 16)) * 2.0).astype(
        jnp.bfloat16
    )
    out_bf = jax.block_until_ready(h_swish(x_bf))
    assert out_bf.shape == x_bf.shape and out_bf.dtype == x_bf.dtype
    assert jnp.allclose(
        out_bf.astype(jnp.float32), _h_swish_ref(x_bf), atol=1e-1, rtol=5e-2
    )

    # Tiny tensor (<128 elems): pure-jnp fallback path.
    x_tiny = jax.random.normal(jax.random.PRNGKey(3), (3, 7), jnp.float32) * 4.0
    out_tiny = jax.block_until_ready(h_swish(x_tiny))
    assert jnp.allclose(out_tiny, _h_swish_ref(x_tiny), atol=1e-6, rtol=1e-6)

    print("KERNEL_OK")
</pallas_src>

<mosaic_0001>
module attributes {stable_mosaic.version = 11 : i64} {
  func.func @_h_swish_kernel(%arg0: i32, %arg1: memref<8x128xf32, #tpu.memory_space<vmem>>, %arg2: memref<8x128xf32, #tpu.memory_space<vmem>>) attributes {dimension_semantics = [#tpu.dimension_semantics<parallel>], iteration_bounds = array<i64: 2>, scalar_prefetch = 0 : i64, scratch_operands = 0 : i64, tpu.core_type = #tpu.core_type<tc>, window_params = [{transform_indices = @transform_0, window_bounds = array<i64: 8, 128>}, {transform_indices = @transform_1, window_bounds = array<i64: 8, 128>}]} {
    %c0 = arith.constant 0 : index
    %c0_0 = arith.constant 0 : index
    %0 = vector.load %arg1[%c0, %c0_0] : memref<8x128xf32, #tpu.memory_space<vmem>>, vector<8x128xf32>
    %cst = arith.constant 3.000000e+00 : f32
    %1 = vector.broadcast %cst : f32 to vector<8x128xf32>
    %2 = arith.addf %0, %1 : vector<8x128xf32>
    %cst_1 = arith.constant 0.000000e+00 : f32
    %cst_2 = arith.constant 6.000000e+00 : f32
    %3 = vector.broadcast %cst_1 : f32 to vector<8x128xf32>
    %4 = arith.maximumf %3, %2 : vector<8x128xf32>
    %5 = vector.broadcast %cst_2 : f32 to vector<8x128xf32>
    %6 = arith.minimumf %5, %4 : vector<8x128xf32>
    %cst_3 = arith.constant 0.166666672 : f32
    %7 = vector.broadcast %cst_3 : f32 to vector<8x128xf32>
    %8 = arith.mulf %6, %7 : vector<8x128xf32>
    %9 = arith.mulf %0, %8 : vector<8x128xf32>
    %c0_4 = arith.constant 0 : index
    %c0_5 = arith.constant 0 : index
    %10 = vector.load %arg2[%c0_4, %c0_5] : memref<8x128xf32, #tpu.memory_space<vmem>>, vector<8x128xf32>
    tpu.vector_store %arg2[%c0_4, %c0_5], %9 {strides = array<i32>} : memref<8x128xf32, #tpu.memory_space<vmem>>, vector<8x128xf32>,
    return
  }
  func.func @transform_0(%arg0: i32) -> (i32, i32) {
    %c0_i32 = arith.constant 0 : i32
    %c0_i32_0 = arith.constant 0 : i32
    return %arg0, %c0_i32 : i32, i32
  }
  func.func @transform_1(%arg0: i32) -> (i32, i32) {
    %c0_i32 = arith.constant 0 : i32
    %c0_i32_0 = arith.constant 0 : i32
    return %arg0, %c0_i32 : i32, i32
  }
}

</mosaic_0001>

<llo_original>
// kernel: tpu_custom_call.1
$region0: #{tpu_custom_call.1}
  #allocation0 [shape = 'u32[]', space=smem, size = 0x4, offset = 0x4, fixed_abs, tag = 'smem constant byte address 0x4 - core index']
  #allocation1 [shape = 'u32[72,128]{1,0:T(1,128)}', space=vmem, size = 0x9000, scoped, tag = 'internal scratch']
  %s0 = inlined_call_operand.hbm [shape: f32[16,128], index: 0, kind: input, shape index: {}]
  %s1 = inlined_call_operand.hbm [shape: f32[16,128], index: 1, kind: output, shape index: {}]
  %s2 = sld [smem:[#allocation0]]
  $region41: #{tpu_custom_call.1} parent=0
    _
  %s4 = ssub.s32 1, %s2
  %s5 = scalar_select 0, %s4, %s2
  $region1: #{tpu_custom_call.1} parent=0
    #allocation2 [shape = 'u8[8192]{0}', space=vmem, size = 0x2000, scoped, tag = 'input window, operand 0']
    #allocation3 [shape = 's32[2]{0}', space=sflag, size = 0x8, scoped, tag = 'scoped memory for tpu_custom_call.1']
    #allocation4 [shape = 's32[2]{0}', space=sflag, size = 0x8, scoped, tag = 'scoped memory for tpu_custom_call.1']
    #allocation5 [shape = 'u8[8192]{0}', space=vmem, size = 0x2000, scoped, tag = 'output window, operand 0']
    %6 = vsyncpa [#allocation3], 0
    %s7 = scalar_lea.sflag [#allocation3], 1
    %8 = vsyncpa %s7, 0
    %9 = vsyncpa [#allocation4], 0
    %s10 = scalar_lea.sflag [#allocation4], 1
    %11 = vsyncpa %s10, 0
    loop: start=0, step=1, limit=4
    $region2: #{tpu_custom_call.1} parent=1 // loop_pre_header
      _
    $region3: #{tpu_custom_call.1} parent=1 // loop_header
      %s13 = sphi 0, %s17
      %p14 = scmp.ge.s32.totalorder %s13, 4
      %s23 = sphi 0, %s25
      %s26 = sphi 0, %s23
      %s27 = sphi 0, %s26
      %s43 = sphi 0, %s27
      %s49 = sphi 0, %s51
      %s52 = sphi 0, %s49
      %s53 = sphi 0, %s52
      %s69 = sphi 0, %s53
    $region4: #{tpu_custom_call.1} parent=1 // loop_header_branch
      %16 = sbr.rel (%p14) target = $region8
    $region5: #{tpu_custom_call.1} parent=1 // loop_body
      %s18 = ssub.s32 %s13, 1
      %s19 = ssub.s32 %s13, 2
      %s20 = sadd.s32 %s13, 1
      %s21 = ssub.s32 %s13, %s20
      %p22 = scmp.eq.s32.totalorder %s21, 0
      %s24 = sadd.s32 %s23, 1
      %s25 = scalar_select %p22, %s23, %s24
      %p28 = pneg %p22
      %p29 = scmp.eq.s32.totalorder %s13, 1
      %p30 = por %p28, %p29
      %p31 = scmp.ne.s32.totalorder %s23, %s26
      %p32 = scmp.eq.s32.totalorder %s13, 0
      %p33 = por %p31, %p32
      %p34 = scmp.ne.s32.totalorder %s23, %s26
      %p35 = scmp.eq.s32.totalorder %s18, 1
      %p36 = por %p34, %p35
      %p37 = scmp.ne.s32.totalorder %s26, %s27
      %p38 = scmp.eq.s32.totalorder %s18, 0
      %p39 = por %p37, %p38
      %p40 = scmp.ne.s32.totalorder %s26, %s27
      %p41 = scmp.eq.s32.totalorder %s19, 1
      %p42 = por %p40, %p41
      %p44 = scmp.ne.s32.totalorder %s27, %s43
      %p45 = scmp.eq.s32.totalorder %s19, 0
      %p46 = por %p44, %p45
      %s47 = ssub.s32 %s13, %s20
      %p48 = scmp.eq.s32.totalorder %s47, 0
      %s50 = sadd.s32 %s49, 1
      %s51 = scalar_select %p48, %s49, %s50
      %p54 = pneg %p48
      %p55 = scmp.eq.s32.totalorder %s13, 1
      %p56 = por %p54, %p55
      %p57 = scmp.ne.s32.totalorder %s49, %s52
      %p58 = scmp.eq.s32.totalorder %s13, 0
      %p59 = por %p57, %p58
      %p60 = scmp.ne.s32.totalorder %s49, %s52
      %p61 = scmp.eq.s32.totalorder %s18, 1
      %p62 = por %p60, %p61
      %p63 = scmp.ne.s32.totalorder %s52, %s53
      %p64 = scmp.eq.s32.totalorder %s18, 0
      %p65 = por %p63, %p64
      %p66 = scmp.ne.s32.totalorder %s52, %s53
      %p67 = scmp.eq.s32.totalorder %s19, 1
      %p68 = por %p66, %p67
      %p70 = scmp.ne.s32.totalorder %s53, %s69
      %p71 = scmp.eq.s32.totalorder %s19, 0
      %p72 = por %p70, %p71
      %p73 = scmp.le.s32.totalorder 1, %s13
      %p74 = scmp.lt.s32.totalorder %s13, 3
      %p75 = pnand %p73, %p74
      %p76 = pneg %p75
      // Predicated region
      $region9: #{tpu_custom_call.1} parent=5 // pred_check
        _
      $region10: #{tpu_custom_call.1} parent=5 // pred_check_branch
        %78 = sbr.rel (%p75) target = $region12
      $region11: #{tpu_custom_call.1} parent=5 // pred_region
        %s79 = ssub.s32 %s13, 1
      $region12: #{tpu_custom_call.1} parent=5 // pred_fallthru
        _
      %p80 = scmp.lt.s32.totalorder %s13, 2
      // Predicated region
      $region13: #{tpu_custom_call.1} parent=5 // pred_check
        %p81 = pneg %p80
      $region14: #{tpu_custom_call.1} parent=5 // pred_check_branch
        %83 = sbr.rel (%p81) target = $region16
      $region15: #{tpu_custom_call.1} parent=5 // pred_region
        // Predicated region
        $region17: #{tpu_custom_call.1} parent=15 // pred_check
          %p84 = pneg %p33
        $region18: #{tpu_custom_call.1} parent=15 // pred_check_branch
          %86 = sbr.rel (%p84) target = $region20
        $region19: #{tpu_custom_call.1} parent=15 // pred_region
          %s87 = sand.u32 %s23, 1
          %s88 = scalar_lea.sflag [#allocation3], %s87
          %s89 = sand.u32 %s23, 1
          %s90 = smul.addr %s89, 8
          %s91 = scalar_lea.vmem [#allocation2], %s90
          %93 = vsyncadd %s88, 0
          %s94 = smul.addr %s13, 8
          %s95 = scalar_lea.hbm %s0, %s94
          %s97 = sshll.u32 %s95, 4
          %s98 = int_to_ptr.hbm [resolvable:$true] %s97
          %s99 = sshll.u32 %s91, 4
          %s100 = int_to_ptr.vmem [resolvable:$true] %s99
          %102 = dma.hbm_to_vmem [thread:$0]  %s98, 128, %s100, %s88
        $region20: #{tpu_custom_call.1} parent=15 // pred_fallthru
          _
      $region16: #{tpu_custom_call.1} parent=5 // pred_fallthru
        _
      %p103 = scmp.le.s32.totalorder 1, %s13
      %p104 = scmp.lt.s32.totalorder %s13, 3
      %p105 = pnand %p103, %p104
      %p106 = pneg %p105
      // Predicated region
      $region21: #{tpu_custom_call.1} parent=5 // pred_check
        _
      $region22: #{tpu_custom_call.1} parent=5 // pred_check_branch
        %108 = sbr.rel (%p105) target = $region24
      $region23: #{tpu_custom_call.1} parent=5 // pred_region
        %s109 = ssub.s32 %s13, 1
        %s110 = sand.u32 %s26, 1
        %s111 = scalar_lea.sflag [#allocation3], %s110
        %s112 = sand.u32 %s26, 1
        %s113 = smul.addr %s112, 8
        %s114 = scalar_lea.vmem [#allocation2], %s113
        // Predicated region
        $region25: #{tpu_custom_call.1} parent=23 // pred_check
          %p115 = pneg %p39
        $region26: #{tpu_custom_call.1} parent=23 // pred_check_branch
          %117 = sbr.rel (%p115) target = $region28
        $region27: #{tpu_custom_call.1} parent=23 // pred_region
          %119 = dma.done %s111, 128
        $region28: #{tpu_custom_call.1} parent=23 // pred_fallthru
          _
        %s120 = sand.u32 %s26, 1
        %s121 = scalar_lea.sflag [#allocation3], %s120
        %s122 = sand.u32 %s26, 1
        %s123 = smul.addr %s122, 8
        %s124 = scalar_lea.vmem [#allocation2], %s123
        %p125 = pneg %p39
        %p126 = pneg %p36
        %p127 = pneg %p65
        %p128 = pneg %p62
        %s129 = sand.u32 %s52, 1
        %s130 = scalar_lea.sflag [#allocation4], %s129
        %s131 = sand.u32 %s52, 1
        %s132 = smul.addr %s131, 8
        %s133 = scalar_lea.vmem [#allocation5], %s132
        %v134 = vld [vmem:[%s114] sm:$0xff]
        %v135 = vadd.f32 %v134, 3.0
        %v136 = vmax.f32 %v135, 0.0
        %v137 = vmin.f32 %v136, 6.0
        %v138 = vmul.f32 %v137, 0.16666667
        %v139 = vmul.f32 %v134, %v138
        %140 = vst [vmem:[%s133] sm:$0xff] %v139
        %s141 = sand.u32 %s52, 1
        %s142 = scalar_lea.sflag [#allocation4], %s141
        %s143 = sand.u32 %s52, 1
        %s144 = smul.addr %s143, 8
        %s145 = scalar_lea.vmem [#allocation5], %s144
        // Predicated region
        $region29: #{tpu_custom_call.1} parent=23 // pred_check
          %p146 = pneg %p62
        $region30: #{tpu_custom_call.1} parent=23 // pred_check_branch
          %148 = sbr.rel (%p146) target = $region32
        $region31: #{tpu_custom_call.1} parent=23 // pred_region
          %150 = vsyncadd %s142, 0
          %s151 = smul.addr %s18, 8
          %s152 = scalar_lea.hbm %s1, %s151
          %s154 = sshll.u32 %s145, 4
          %s155 = int_to_ptr.vmem [resolvable:$true] %s154
          %s156 = sshll.u32 %s152, 4
          %s157 = int_to_ptr.hbm [resolvable:$true] %s156
          %159 = dma.vmem_to_hbm [thread:$0]  %s155, 128, %s157, %s142
        $region32: #{tpu_custom_call.1} parent=23 // pred_fallthru
          _
      $region24: #{tpu_custom_call.1} parent=5 // pred_fallthru
        _
      %p160 = scmp.le.s32.totalorder 2, %s13
      // Predicated region
      $region33: #{tpu_custom_call.1} parent=5 // pred_check
        %p161 = pneg %p160
      $region34: #{tpu_custom_call.1} parent=5 // pred_check_branch
        %163 = sbr.rel (%p161) target = $region36
      $region35: #{tpu_custom_call.1} parent=5 // pred_region
        %s164 = ssub.s32 %s13, 2
        // Predicated region
        $region37: #{tpu_custom_call.1} parent=35 // pred_check
          %p165 = pneg %p68
        $region38: #{tpu_custom_call.1} parent=35 // pred_check_branch
          %167 = sbr.rel (%p165) target = $region40
        $region39: #{tpu_custom_call.1} parent=35 // pred_region
          %s168 = sand.u32 %s53, 1
          %s169 = scalar_lea.sflag [#allocation4], %s168
          %s170 = sand.u32 %s53, 1
          %s171 = smul.addr %s170, 8
          %s172 = scalar_lea.vmem [#allocation5], %s171
          %174 = dma.done %s169, 128
        $region40: #{tpu_custom_call.1} parent=35 // pred_fallthru
          _
      $region36: #{tpu_custom_call.1} parent=5 // pred_fallthru
        _
    $region6: #{tpu_custom_call.1} parent=1 // loop_footer
      %s17 = sadd.s32 1, %s13
    $region7: #{tpu_custom_call.1} parent=1 // loop_footer_branch
      %12 = sbr.rel target = $region3
    $region8: #{tpu_custom_call.1} parent=1 // loop_exit
      _
    %175 = vsyncpa [#allocation3], 1
    %s176 = scalar_lea.sflag [#allocation3], 1
    %177 = vsyncpa %s176, 1
    %178 = vsyncpa [#allocation4], 1
    %s179 = scalar_lea.sflag [#allocation4], 1
    %180 = vsyncpa %s179, 1

</llo_original>
